<compile_context>
chip_gen: v7x
topology: tpu7x:2x2x1
jax: 0.10.0
libtpu: 0.0.40
codegen_flags: <defaults>
</compile_context>

<pallas_src>
import functools

import jax
import jax.numpy as jnp
from jax.experimental import pallas as pl
from jax.experimental.pallas import tpu as pltpu


def _round_up(x, m):
    return ((x + m - 1) // m) * m


# ----------------------------------------------------------------------------
# Kernel: fused MLP over one (tile_batch, num_inputs) tile of rows.
# ----------------------------------------------------------------------------
def _mlp_kernel(n_layers, x_ref, *refs):
    # refs = (w0, b0, w1, b1, ..., w_{L-1}, b_{L-1}, out_ref)
    out_ref = refs[-1]
    h = x_ref[...].astype(jnp.float32)
    for i in range(n_layers):
        w = refs[2 * i][...]
        b = refs[2 * i + 1][...]          # (1, d_out) -> broadcasts over batch tile
        z = jnp.dot(h, w, preferred_element_type=jnp.float32) + b
        if i < n_layers - 1:
            h = jnp.tanh(z)               # hidden layers: tanh (EUP)
        else:
            h = jax.nn.sigmoid(z)         # final layer: sigmoid (EUP, no f32 divide)
    out_ref[...] = h.astype(out_ref.dtype)


# ----------------------------------------------------------------------------
# Zero-pad hidden dims to multiples of 128 so hidden-layer activations and
# elementwise ops are lane-dense.  Padded columns have zero weights + zero
# bias -> pre-activation 0 -> tanh(0) = 0 -> they feed zero-padded weight rows
# of the next layer: the math is unchanged.
# ----------------------------------------------------------------------------
def _pad_params_lane_dense(params):
    n_layers = len(params)
    padded = []
    prev_out_pad = params[0][0].shape[0]          # input dim left unpadded
    for li, (w, b) in enumerate(params):
        d_in, d_out = w.shape
        d_in_pad = prev_out_pad
        d_out_pad = d_out if li == n_layers - 1 else _round_up(d_out, 128)
        w_p = jnp.zeros((d_in_pad, d_out_pad), w.dtype).at[:d_in, :d_out].set(w)
        b_p = jnp.zeros((1, d_out_pad), b.dtype).at[:, :d_out].set(b)
        padded.append((w_p, b_p))
        prev_out_pad = d_out_pad
    return padded


def mlp_forward(x, params, *, tile_batch=2048, preactivation_noise_std=0.0):
    """x: (batch, num_inputs) f32; params: list of (W, b), W (in, out), b (1, out)."""
    if preactivation_noise_std != 0.0:
        # TODO(synk): add in-kernel PRNG noise (pltpu.prng_seed + pltpu.stateful_normal).
        raise NotImplementedError("preactivation_noise_std != 0 not supported")

    n_layers = len(params)
    params = _pad_params_lane_dense(params)
    batch, num_inputs = x.shape
    num_outputs = params[-1][0].shape[1]

    # Batch tile: multiple of 8 sublanes, capped by the (rounded-up) batch.
    # 2048 rows * (32 in + 128 hidden + 1 out) f32 is well under the default
    # scoped-VMEM limit on v5e/v6e/v7x even with double buffering.
    tb = max(8, min(_round_up(tile_batch, 8), _round_up(batch, 8)))
    batch_pad = _round_up(batch, tb)
    if batch_pad != batch:
        x = jnp.pad(x, ((0, batch_pad - batch), (0, 0)))

    grid = (batch_pad // tb,)

    # x / out stream with the grid; weights & biases use constant index maps
    # and full-array blocks, so they are fetched once and stay VMEM-resident.
    in_specs = [pl.BlockSpec((tb, num_inputs), lambda i: (i, 0))]
    flat_args = [x]
    for w, b in params:
        in_specs.append(pl.BlockSpec(w.shape, lambda i: (0, 0)))
        in_specs.append(pl.BlockSpec(b.shape, lambda i: (0, 0)))
        flat_args.extend([w, b])

    out = pl.pallas_call(
        functools.partial(_mlp_kernel, n_layers),
        out_shape=jax.ShapeDtypeStruct((batch_pad, num_outputs), jnp.float32),
        grid=grid,
        in_specs=in_specs,
        out_specs=pl.BlockSpec((tb, num_outputs), lambda i: (i, 0)),
        compiler_params=pltpu.CompilerParams(
            dimension_semantics=("parallel",),   # megacore-shard batch on v7x
        ),
    )(*flat_args)
    return out[:batch]


# ----------------------------------------------------------------------------
# Deterministic parameter init mirroring MLP.reset_parameters():
#   weight, bias ~ N(0, init_std)
#   middle layers [1:-1]: weight /= sqrt(1 - sparseness); weight *= Bernoulli(1 - sparseness)
# ----------------------------------------------------------------------------
def init_mlp_params(key, num_inputs, num_layers, num_hidden, num_outputs,
                    init_std=0.1, sparseness=0.2):
    dims = [num_inputs] + [num_hidden] * (num_layers - 1) + [num_outputs]
    params = []
    for li in range(num_layers):
        d_in, d_out = dims[li], dims[li + 1]
        key, kw, kb, km = jax.random.split(key, 4)
        w = init_std * jax.random.normal(kw, (d_in, d_out), dtype=jnp.float32)
        b = init_std * jax.random.normal(kb, (1, d_out), dtype=jnp.float32)
        if sparseness > 0.0 and 0 < li < num_layers - 1:
            w = w / jnp.sqrt(1.0 - sparseness)
            mask = jax.random.bernoulli(km, p=1.0 - sparseness, shape=w.shape)
            w = w * mask.astype(w.dtype)
        params.append((w, b))
    return params


if __name__ == "__main__":
    # Small shapes consistent with the module: MLP(num_inputs=32, num_layers=3,
    # num_hidden=64, num_outputs=1).  batch=200 with tile_batch=128 exercises a
    # 2-step batch grid plus the padding / slice path.
    batch, num_inputs, num_layers, num_hidden, num_outputs = 200, 32, 3, 64, 1

    key = jax.random.PRNGKey(0)
    key, kx = jax.random.split(key)
    x = jax.random.normal(kx, (batch, num_inputs), dtype=jnp.float32)
    params = init_mlp_params(key, num_inputs, num_layers, num_hidden, num_outputs)

    out = mlp_forward(x, params, tile_batch=128)
    out = jax.block_until_ready(out)

    # Pure-JAX reference of the same math (unpadded params).
    h = x
    for i, (w, b) in enumerate(params):
        z = h @ w + b
        h = jnp.tanh(z) if i < num_layers - 1 else jax.nn.sigmoid(z)
    assert out.shape == (batch, num_outputs)
    assert jnp.allclose(out, h, atol=2e-5, rtol=2e-5)

    print("KERNEL_OK")
</pallas_src>

<mosaic_0001>
module attributes {stable_mosaic.version = 11 : i64} {
  func.func @_mlp_kernel(%arg0: i32, %arg1: memref<128x32xf32, #tpu.memory_space<vmem>>, %arg2: memref<32x128xf32, #tpu.memory_space<vmem>>, %arg3: memref<1x128xf32, #tpu.memory_space<vmem>>, %arg4: memref<128x128xf32, #tpu.memory_space<vmem>>, %arg5: memref<1x128xf32, #tpu.memory_space<vmem>>, %arg6: memref<128x1xf32, #tpu.memory_space<vmem>>, %arg7: memref<1x1xf32, #tpu.memory_space<vmem>>, %arg8: memref<128x1xf32, #tpu.memory_space<vmem>>) attributes {dimension_semantics = [#tpu.dimension_semantics<parallel>], iteration_bounds = array<i64: 2>, scalar_prefetch = 0 : i64, scratch_operands = 0 : i64, tpu.core_type = #tpu.core_type<tc>, window_params = [{transform_indices = @transform_0, window_bounds = array<i64: 128, 32>}, {pipeline_mode = #tpu.pipeline_mode<synchronous>, transform_indices = @transform_1, window_bounds = array<i64: 32, 128>}, {pipeline_mode = #tpu.pipeline_mode<synchronous>, transform_indices = @transform_2, window_bounds = array<i64: 1, 128>}, {pipeline_mode = #tpu.pipeline_mode<synchronous>, transform_indices = @transform_3, window_bounds = array<i64: 128, 128>}, {pipeline_mode = #tpu.pipeline_mode<synchronous>, transform_indices = @transform_4, window_bounds = array<i64: 1, 128>}, {pipeline_mode = #tpu.pipeline_mode<synchronous>, transform_indices = @transform_5, window_bounds = array<i64: 128, 1>}, {pipeline_mode = #tpu.pipeline_mode<synchronous>, transform_indices = @transform_6, window_bounds = array<i64: 1, 1>}, {transform_indices = @transform_7, window_bounds = array<i64: 128, 1>}]} {
    %c0 = arith.constant 0 : index
    %c0_0 = arith.constant 0 : index
    %0 = vector.load %arg1[%c0, %c0_0] : memref<128x32xf32, #tpu.memory_space<vmem>>, vector<128x32xf32>
    %c0_1 = arith.constant 0 : index
    %c0_2 = arith.constant 0 : index
    %1 = vector.load %arg2[%c0_1, %c0_2] : memref<32x128xf32, #tpu.memory_space<vmem>>, vector<32x128xf32>
    %c0_3 = arith.constant 0 : index
    %c0_4 = arith.constant 0 : index
    %2 = vector.load %arg3[%c0_3, %c0_4] : memref<1x128xf32, #tpu.memory_space<vmem>>, vector<1x128xf32>
    %cst = arith.constant dense<0.000000e+00> : vector<128x128xf32>
    %3 = tpu.matmul %0, %1, %cst {dimension_numbers = #tpu.dot_dimension_numbers<[1], [0], [0], [1], [0, 0, 1, 1], [], []>} : vector<128x32xf32>, vector<32x128xf32>, vector<128x128xf32> -> vector<128x128xf32>
    %4 = vector.broadcast %2 : vector<1x128xf32> to vector<128x128xf32>
    %5 = arith.addf %3, %4 : vector<128x128xf32>
    %6 = math.tanh %5 : vector<128x128xf32>
    %c0_5 = arith.constant 0 : index
    %c0_6 = arith.constant 0 : index
    %7 = vector.load %arg4[%c0_5, %c0_6] : memref<128x128xf32, #tpu.memory_space<vmem>>, vector<128x128xf32>
    %c0_7 = arith.constant 0 : index
    %c0_8 = arith.constant 0 : index
    %8 = vector.load %arg5[%c0_7, %c0_8] : memref<1x128xf32, #tpu.memory_space<vmem>>, vector<1x128xf32>
    %cst_9 = arith.constant dense<0.000000e+00> : vector<128x128xf32>
    %9 = tpu.matmul %6, %7, %cst_9 {dimension_numbers = #tpu.dot_dimension_numbers<[1], [0], [0], [1], [0, 0, 1, 1], [], []>} : vector<128x128xf32>, vector<128x128xf32>, vector<128x128xf32> -> vector<128x128xf32>
    %10 = vector.broadcast %8 : vector<1x128xf32> to vector<128x128xf32>
    %11 = arith.addf %9, %10 : vector<128x128xf32>
    %12 = math.tanh %11 : vector<128x128xf32>
    %c0_10 = arith.constant 0 : index
    %c0_11 = arith.constant 0 : index
    %13 = vector.load %arg6[%c0_10, %c0_11] : memref<128x1xf32, #tpu.memory_space<vmem>>, vector<128x1xf32>
    %c0_12 = arith.constant 0 : index
    %c0_13 = arith.constant 0 : index
    %14 = vector.load %arg7[%c0_12, %c0_13] : memref<1x1xf32, #tpu.memory_space<vmem>>, vector<1x1xf32>
    %cst_14 = arith.constant dense<0.000000e+00> : vector<128x1xf32>
    %15 = tpu.matmul %12, %13, %cst_14 {dimension_numbers = #tpu.dot_dimension_numbers<[1], [0], [0], [1], [0, 0, 1, 1], [], []>} : vector<128x128xf32>, vector<128x1xf32>, vector<128x1xf32> -> vector<128x1xf32>
    %16 = vector.broadcast %14 : vector<1x1xf32> to vector<128x1xf32>
    %17 = arith.addf %15, %16 : vector<128x1xf32>
    %18 = arith.negf %17 : vector<128x1xf32>
    %19 = math.exp %18 : vector<128x1xf32>
    %cst_15 = arith.constant 1.000000e+00 : f32
    %20 = vector.broadcast %cst_15 : f32 to vector<128x1xf32>
    %21 = arith.addf %20, %19 : vector<128x1xf32>
    %22 = arith.divf %20, %21 : vector<128x1xf32>
    %c0_16 = arith.constant 0 : index
    %c0_17 = arith.constant 0 : index
    %23 = vector.load %arg8[%c0_16, %c0_17] : memref<128x1xf32, #tpu.memory_space<vmem>>, vector<128x1xf32>
    tpu.vector_store %arg8[%c0_16, %c0_17], %22 {strides = array<i32>} : memref<128x1xf32, #tpu.memory_space<vmem>>, vector<128x1xf32>,
    return
  }
  func.func @transform_0(%arg0: i32) -> (i32, i32) {
    %c0_i32 = arith.constant 0 : i32
    %c0_i32_0 = arith.constant 0 : i32
    return %arg0, %c0_i32 : i32, i32
  }
  func.func @transform_1(%arg0: i32) -> (i32, i32) {
    %c0_i32 = arith.constant 0 : i32
    %c0_i32_0 = arith.constant 0 : i32
    %c0_i32_1 = arith.constant 0 : i32
    return %c0_i32, %c0_i32_0 : i32, i32
  }
  func.func @transform_2(%arg0: i32) -> (i32, i32) {
    %c0_i32 = arith.constant 0 : i32
    %c0_i32_0 = arith.constant 0 : i32
    %c0_i32_1 = arith.constant 0 : i32
    return %c0_i32, %c0_i32_0 : i32, i32
  }
  func.func @transform_3(%arg0: i32) -> (i32, i32) {
    %c0_i32 = arith.constant 0 : i32
    %c0_i32_0 = arith.constant 0 : i32
    %c0_i32_1 = arith.constant 0 : i32
    return %c0_i32, %c0_i32_0 : i32, i32
  }
  func.func @transform_4(%arg0: i32) -> (i32, i32) {
    %c0_i32 = arith.constant 0 : i32
    %c0_i32_0 = arith.constant 0 : i32
    %c0_i32_1 = arith.constant 0 : i32
    return %c0_i32, %c0_i32_0 : i32, i32
  }
  func.func @transform_5(%arg0: i32) -> (i32, i32) {
    %c0_i32 = arith.constant 0 : i32
    %c0_i32_0 = arith.constant 0 : i32
    %c0_i32_1 = arith.constant 0 : i32
    return %c0_i32, %c0_i32_0 : i32, i32
  }
  func.func @transform_6(%arg0: i32) -> (i32, i32) {
    %c0_i32 = arith.constant 0 : i32
    %c0_i32_0 = arith.constant 0 : i32
    %c0_i32_1 = arith.constant 0 : i32
    return %c0_i32, %c0_i32_0 : i32, i32
  }
  func.func @transform_7(%arg0: i32) -> (i32, i32) {
    %c0_i32 = arith.constant 0 : i32
    %c0_i32_0 = arith.constant 0 : i32
    return %arg0, %c0_i32 : i32, i32
  }
}

</mosaic_0001>

<llo_original>
// kernel: tpu_custom_call.1
$region0: #{tpu_custom_call.1}
  #allocation0 [shape = 'u32[]', space=smem, size = 0x4, offset = 0x4, fixed_abs, tag = 'smem constant byte address 0x4 - core index']
  #allocation1 [shape = 'u32[144,128]{1,0:T(1,128)}', space=vmem, size = 0x12000, scoped, tag = 'internal scratch']
  #allocation2 [shape = 'f32[1,1]{1,0:T(1,128)S(1)}', space=vmem, size = 0x200, scoped, tag = 'scoped memory for tpu_custom_call.1']
  %s0 = inlined_call_operand.vmem [shape: f32[256,32], index: 0, kind: input, shape index: {}]
  %s1 = inlined_call_operand.vmem [shape: f32[32,128], index: 1, kind: input, shape index: {}]
  %s2 = inlined_call_operand.vmem [shape: f32[1,128], index: 2, kind: input, shape index: {}]
  %s3 = inlined_call_operand.vmem [shape: f32[128,128], index: 3, kind: input, shape index: {}]
  %s4 = inlined_call_operand.vmem [shape: f32[1,128], index: 4, kind: input, shape index: {}]
  %s5 = inlined_call_operand.vmem [shape: f32[128,1], index: 5, kind: input, shape index: {}]
  %s6 = inlined_call_operand.<no memory space> [shape: f32[1,1], index: 6, kind: input, shape index: {}]
  %s7 = inlined_call_operand.vmem [shape: f32[256,1], index: 7, kind: output, shape index: {}]
  %s8 = sld [smem:[#allocation0]]
  $region61: #{tpu_custom_call.1} parent=0
    _
  %s10 = ssub.s32 1, %s8
  %s11 = scalar_select 0, %s10, %s8
  %v12 = vstv %s6
  %13 = vst [vmem:[#allocation2] sm:$0x1] %v12
  loop: start=0, step=1, limit=4
  $region2: #{tpu_custom_call.1} parent=0 // loop_pre_header
    _
  $region3: #{tpu_custom_call.1} parent=0 // loop_header
    %s15 = sphi 0, %s19
    %p16 = scmp.ge.s32.totalorder %s15, 4
    %s25 = sphi 0, %s27
    %s28 = sphi 0, %s25
    %s29 = sphi 0, %s28
    %s45 = sphi 0, %s29
    %s49 = sphi 0, %s49
    %s51 = sphi 0, %s49
    %s52 = sphi 0, %s51
    %s66 = sphi 0, %s52
    %s70 = sphi 0, %s70
    %s72 = sphi 0, %s70
    %s73 = sphi 0, %s72
    %s87 = sphi 0, %s73
    %s91 = sphi 0, %s91
    %s93 = sphi 0, %s91
    %s94 = sphi 0, %s93
    %s108 = sphi 0, %s94
    %s112 = sphi 0, %s112
    %s114 = sphi 0, %s112
    %s115 = sphi 0, %s114
    %s129 = sphi 0, %s115
    %s133 = sphi 0, %s133
    %s135 = sphi 0, %s133
    %s136 = sphi 0, %s135
    %s150 = sphi 0, %s136
    %s154 = sphi 0, %s154
    %s156 = sphi 0, %s154
    %s157 = sphi 0, %s156
    %s171 = sphi 0, %s157
    %s177 = sphi 0, %s179
    %s180 = sphi 0, %s177
    %s181 = sphi 0, %s180
    %s197 = sphi 0, %s181
  $region4: #{tpu_custom_call.1} parent=0 // loop_header_branch
    %18 = sbr.rel (%p16) target = $region8
  $region5: #{tpu_custom_call.1} parent=0 // loop_body
    %s20 = ssub.s32 %s15, 1
    %s21 = ssub.s32 %s15, 2
    %s22 = sadd.s32 %s15, 1
    %s23 = ssub.s32 %s15, %s22
    %p24 = scmp.eq.s32.totalorder %s23, 0
    %s26 = sadd.s32 %s25, 1
    %s27 = scalar_select %p24, %s25, %s26
    %p30 = pneg %p24
    %p31 = scmp.eq.s32.totalorder %s15, 1
    %p32 = por %p30, %p31
    %p33 = scmp.ne.s32.totalorder %s25, %s28
    %p34 = scmp.eq.s32.totalorder %s15, 0
    %p35 = por %p33, %p34
    %p36 = scmp.ne.s32.totalorder %s25, %s28
    %p37 = scmp.eq.s32.totalorder %s20, 1
    %p38 = por %p36, %p37
    %p39 = scmp.ne.s32.totalorder %s28, %s29
    %p40 = scmp.eq.s32.totalorder %s20, 0
    %p41 = por %p39, %p40
    %p42 = scmp.ne.s32.totalorder %s28, %s29
    %p43 = scmp.eq.s32.totalorder %s21, 1
    %p44 = por %p42, %p43
    %p46 = scmp.ne.s32.totalorder %s29, %s45
    %p47 = scmp.eq.s32.totalorder %s21, 0
    %p48 = por %p46, %p47
    %s50 = sadd.s32 %s49, 1
    %p53 = scmp.eq.s32.totalorder %s15, 1
    %p54 = scmp.ne.s32.totalorder %s49, %s51
    %p55 = scmp.eq.s32.totalorder %s15, 0
    %p56 = por %p54, %p55
    %p57 = scmp.ne.s32.totalorder %s49, %s51
    %p58 = scmp.eq.s32.totalorder %s20, 1
    %p59 = por %p57, %p58
    %p60 = scmp.ne.s32.totalorder %s51, %s52
    %p61 = scmp.eq.s32.totalorder %s20, 0
    %p62 = por %p60, %p61
    %p63 = scmp.ne.s32.totalorder %s51, %s52
    %p64 = scmp.eq.s32.totalorder %s21, 1
    %p65 = por %p63, %p64
    %p67 = scmp.ne.s32.totalorder %s52, %s66
    %p68 = scmp.eq.s32.totalorder %s21, 0
    %p69 = por %p67, %p68
    %s71 = sadd.s32 %s70, 1
    %p74 = scmp.eq.s32.totalorder %s15, 1
    %p75 = scmp.ne.s32.totalorder %s70, %s72
    %p76 = scmp.eq.s32.totalorder %s15, 0
    %p77 = por %p75, %p76
    %p78 = scmp.ne.s32.totalorder %s70, %s72
    %p79 = scmp.eq.s32.totalorder %s20, 1
    %p80 = por %p78, %p79
    %p81 = scmp.ne.s32.totalorder %s72, %s73
    %p82 = scmp.eq.s32.totalorder %s20, 0
    %p83 = por %p81, %p82
    %p84 = scmp.ne.s32.totalorder %s72, %s73
    %p85 = scmp.eq.s32.totalorder %s21, 1
    %p86 = por %p84, %p85
    %p88 = scmp.ne.s32.totalorder %s73, %s87
    %p89 = scmp.eq.s32.totalorder %s21, 0
    %p90 = por %p88, %p89
    %s92 = sadd.s32 %s91, 1
    %p95 = scmp.eq.s32.totalorder %s15, 1
    %p96 = scmp.ne.s32.totalorder %s91, %s93
    %p97 = scmp.eq.s32.totalorder %s15, 0
    %p98 = por %p96, %p97
    %p99 = scmp.ne.s32.totalorder %s91, %s93
    %p100 = scmp.eq.s32.totalorder %s20, 1
    %p101 = por %p99, %p100
    %p102 = scmp.ne.s32.totalorder %s93, %s94
    %p103 = scmp.eq.s32.totalorder %s20, 0
    %p104 = por %p102, %p103
    %p105 = scmp.ne.s32.totalorder %s93, %s94
    %p106 = scmp.eq.s32.totalorder %s21, 1
    %p107 = por %p105, %p106
    %p109 = scmp.ne.s32.totalorder %s94, %s108
    %p110 = scmp.eq.s32.totalorder %s21, 0
    %p111 = por %p109, %p110
    %s113 = sadd.s32 %s112, 1
    %p116 = scmp.eq.s32.totalorder %s15, 1
    %p117 = scmp.ne.s32.totalorder %s112, %s114
    %p118 = scmp.eq.s32.totalorder %s15, 0
    %p119 = por %p117, %p118
    %p120 = scmp.ne.s32.totalorder %s112, %s114
    %p121 = scmp.eq.s32.totalorder %s20, 1
    %p122 = por %p120, %p121
    %p123 = scmp.ne.s32.totalorder %s114, %s115
    %p124 = scmp.eq.s32.totalorder %s20, 0
    %p125 = por %p123, %p124
    %p126 = scmp.ne.s32.totalorder %s114, %s115
    %p127 = scmp.eq.s32.totalorder %s21, 1
    %p128 = por %p126, %p127
    %p130 = scmp.ne.s32.totalorder %s115, %s129
    %p131 = scmp.eq.s32.totalorder %s21, 0
    %p132 = por %p130, %p131
    %s134 = sadd.s32 %s133, 1
    %p137 = scmp.eq.s32.totalorder %s15, 1
    %p138 = scmp.ne.s32.totalorder %s133, %s135
    %p139 = scmp.eq.s32.totalorder %s15, 0
    %p140 = por %p138, %p139
    %p141 = scmp.ne.s32.totalorder %s133, %s135
    %p142 = scmp.eq.s32.totalorder %s20, 1
    %p143 = por %p141, %p142
    %p144 = scmp.ne.s32.totalorder %s135, %s136
    %p145 = scmp.eq.s32.totalorder %s20, 0
    %p146 = por %p144, %p145
    %p147 = scmp.ne.s32.totalorder %s135, %s136
    %p148 = scmp.eq.s32.totalorder %s21, 1
    %p149 = por %p147, %p148
    %p151 = scmp.ne.s32.totalorder %s136, %s150
    %p152 = scmp.eq.s32.totalorder %s21, 0
    %p153 = por %p151, %p152
    %s155 = sadd.s32 %s154, 1
    %p158 = scmp.eq.s32.totalorder %s15, 1
    %p159 = scmp.ne.s32.totalorder %s154, %s156
    %p160 = scmp.eq.s32.totalorder %s15, 0
    %p161 = por %p159, %p160
    %p162 = scmp.ne.s32.totalorder %s154, %s156
    %p163 = scmp.eq.s32.totalorder %s20, 1
    %p164 = por %p162, %p163
    %p165 = scmp.ne.s32.totalorder %s156, %s157
    %p166 = scmp.eq.s32.totalorder %s20, 0
    %p167 = por %p165, %p166
    %p168 = scmp.ne.s32.totalorder %s156, %s157
    %p169 = scmp.eq.s32.totalorder %s21, 1
    %p170 = por %p168, %p169
    %p172 = scmp.ne.s32.totalorder %s157, %s171
    %p173 = scmp.eq.s32.totalorder %s21, 0
    %p174 = por %p172, %p173
    %s175 = ssub.s32 %s15, %s22
    %p176 = scmp.eq.s32.totalorder %s175, 0
    %s178 = sadd.s32 %s177, 1
    %s179 = scalar_select %p176, %s177, %s178
    %p182 = pneg %p176
    %p183 = scmp.eq.s32.totalorder %s15, 1
    %p184 = por %p182, %p183
    %p185 = scmp.ne.s32.totalorder %s177, %s180
    %p186 = scmp.eq.s32.totalorder %s15, 0
    %p187 = por %p185, %p186
    %p188 = scmp.ne.s32.totalorder %s177, %s180
    %p189 = scmp.eq.s32.totalorder %s20, 1
    %p190 = por %p188, %p189
    %p191 = scmp.ne.s32.totalorder %s180, %s181
    %p192 = scmp.eq.s32.totalorder %s20, 0
    %p193 = por %p191, %p192
    %p194 = scmp.ne.s32.totalorder %s180, %s181
    %p195 = scmp.eq.s32.totalorder %s21, 1
    %p196 = por %p194, %p195
    %p198 = scmp.ne.s32.totalorder %s181, %s197
    %p199 = scmp.eq.s32.totalorder %s21, 0
    %p200 = por %p198, %p199
    %p201 = scmp.le.s32.totalorder 1, %s15
    %p202 = scmp.lt.s32.totalorder %s15, 3
    %p203 = pnand %p201, %p202
    %p204 = pneg %p203
    // Predicated region
    $region9: #{tpu_custom_call.1} parent=5 // pred_check
      _
    $region10: #{tpu_custom_call.1} parent=5 // pred_check_branch
      %206 = sbr.rel (%p203) target = $region12
    $region11: #{tpu_custom_call.1} parent=5 // pred_region
      %s207 = ssub.s32 %s15, 1
      // Predicated region
      $region13: #{tpu_custom_call.1} parent=11 // pred_check
        %p208 = pneg %p62
      $region14: #{tpu_custom_call.1} parent=11 // pred_check_branch
        %210 = sbr.rel (%p208) target = $region16
      $region15: #{tpu_custom_call.1} parent=11 // pred_region
        _
      $region16: #{tpu_custom_call.1} parent=11 // pred_fallthru
        _
      // Predicated region
      $region17: #{tpu_custom_call.1} parent=11 // pred_check
        %p211 = pneg %p83
      $region18: #{tpu_custom_call.1} parent=11 // pred_check_branch
        %213 = sbr.rel (%p211) target = $region20
      $region19: #{tpu_custom_call.1} parent=11 // pred_region
        _
      $region20: #{tpu_custom_call.1} parent=11 // pred_fallthru
        _
      // Predicated region
      $region21: #{tpu_custom_call.1} parent=11 // pred_check
        %p214 = pneg %p104
      $region22: #{tpu_custom_call.1} parent=11 // pred_check_branch
        %216 = sbr.rel (%p214) target = $region24
      $region23: #{tpu_custom_call.1} parent=11 // pred_region
        _
      $region24: #{tpu_custom_call.1} parent=11 // pred_fallthru
        _
      // Predicated region
      $region25: #{tpu_custom_call.1} parent=11 // pred_check
        %p217 = pneg %p125
      $region26: #{tpu_custom_call.1} parent=11 // pred_check_branch
        %219 = sbr.rel (%p217) target = $region28
      $region27: #{tpu_custom_call.1} parent=11 // pred_region
        _
      $region28: #{tpu_custom_call.1} parent=11 // pred_fallthru
        _
      // Predicated region
      $region29: #{tpu_custom_call.1} parent=11 // pred_check
        %p220 = pneg %p146
      $region30: #{tpu_custom_call.1} parent=11 // pred_check_branch
        %222 = sbr.rel (%p220) target = $region32
      $region31: #{tpu_custom_call.1} parent=11 // pred_region
        _
      $region32: #{tpu_custom_call.1} parent=11 // pred_fallthru
        _
      // Predicated region
      $region33: #{tpu_custom_call.1} parent=11 // pred_check
        %p223 = pneg %p167
      $region34: #{tpu_custom_call.1} parent=11 // pred_check_branch
        %225 = sbr.rel (%p223) target = $region36
      $region35: #{tpu_custom_call.1} parent=11 // pred_region
        _
      $region36: #{tpu_custom_call.1} parent=11 // pred_fallthru
        _
    $region12: #{tpu_custom_call.1} parent=5 // pred_fallthru
      _
    %p226 = scmp.lt.s32.totalorder %s15, 2
    // Predicated region
    $region37: #{tpu_custom_call.1} parent=5 // pred_check
      %p227 = pneg %p226
    $region38: #{tpu_custom_call.1} parent=5 // pred_check_branch
      %229 = sbr.rel (%p227) target = $region40
    $region39: #{tpu_custom_call.1} parent=5 // pred_region
      // Predicated region
      $region41: #{tpu_custom_call.1} parent=39 // pred_check
        %p230 = pneg %p35
      $region42: #{tpu_custom_call.1} parent=39 // pred_check_branch
        %232 = sbr.rel (%p230) target = $region44
      $region43: #{tpu_custom_call.1} parent=39 // pred_region
        %s233 = smul.u32 16, %s15
        %p234 = scmp.lt.s32.totalorder %s233, 31
        %s235 = scalar_select %p234, %s233, 31
        %s236 = smul.addr %s235, 8
        %s237 = scalar_lea.vmem %s0, %s236
        %s238 = smul.u32 16, %s15
      $region44: #{tpu_custom_call.1} parent=39 // pred_fallthru
        _
    $region40: #{tpu_custom_call.1} parent=5 // pred_fallthru
      _
    %p239 = scmp.le.s32.totalorder 1, %s15
    %p240 = scmp.lt.s32.totalorder %s15, 3
    %p241 = pnand %p239, %p240
    %p242 = pneg %p241
    // Predicated region
    $region45: #{tpu_custom_call.1} parent=5 // pred_check
      _
    $region46: #{tpu_custom_call.1} parent=5 // pred_check_branch
      %244 = sbr.rel (%p241) target = $region48
    $region47: #{tpu_custom_call.1} parent=5 // pred_region
      %s245 = ssub.s32 %s15, 1
      %s246 = smul.u32 16, %s20
      %p247 = scmp.lt.s32.totalorder %s246, 31
      %s248 = scalar_select %p247, %s246, 31
      %s249 = smul.addr %s248, 8
      %s250 = scalar_lea.vmem %s0, %s249
      %p251 = pneg %p41
      %p252 = pneg %p38
      %p253 = pneg %p62
      %p254 = pneg %p59
      %p255 = pneg %p83
      %p256 = pneg %p80
      %p257 = pneg %p104
      %p258 = pneg %p101
      %p259 = pneg %p125
      %p260 = pneg %p122
      %p261 = pneg %p146
      %p262 = pneg %p143
      %p263 = pneg %p167
      %p264 = pneg %p164
      %p265 = pneg %p193
      %p266 = pneg %p190
      %s267 = smul.u32 16, %s20
      %p268 = scmp.lt.s32.totalorder %s267, 31
      %s269 = scalar_select %p268, %s267, 31
      %s270 = smul.addr %s269, 8
      %s271 = scalar_lea.vmem %s7, %s270
      %s272 = smul.u32 16, %s20
      %p273 = scmp.lt.s32.totalorder %s272, 31
      %s274 = scalar_select %p273, %s272, 31
      %s275 = smul.addr %s274, 8
      %s276 = scalar_lea.vmem %s0, %s275
      %s277 = smul.u32 16, %s20
      %s278 = smul.u32 16, %s20
      %p279 = scmp.lt.s32.totalorder %s278, 31
      %s280 = scalar_select %p279, %s278, 31
      %s281 = smul.addr %s280, 8
      %s282 = scalar_lea.vmem %s7, %s281
      %s283 = smul.u32 16, %s20
      %v284 = vld [vmem:[%s276] sm:$0xff]
      %v285 = vld [vmem:[%s276 + $0x8] sm:$0xff]
      %v286 = vld [vmem:[%s276 + $0x10] sm:$0xff]
      %v287 = vld [vmem:[%s276 + $0x18] sm:$0xff]
      %v288 = vld [vmem:[%s276 + $0x20] sm:$0xff]
      %v289 = vld [vmem:[%s276 + $0x28] sm:$0xff]
      %v290 = vld [vmem:[%s276 + $0x30] sm:$0xff]
      %v291 = vld [vmem:[%s276 + $0x38] sm:$0xff]
      %v292 = vld [vmem:[%s276 + $0x40] sm:$0xff]
      %v293 = vld [vmem:[%s276 + $0x48] sm:$0xff]
      %v294 = vld [vmem:[%s276 + $0x50] sm:$0xff]
      %v295 = vld [vmem:[%s276 + $0x58] sm:$0xff]
      %v296 = vld [vmem:[%s276 + $0x60] sm:$0xff]
      %v297 = vld [vmem:[%s276 + $0x68] sm:$0xff]
      %v298 = vld [vmem:[%s276 + $0x70] sm:$0xff]
      %v299 = vld [vmem:[%s276 + $0x78] sm:$0xff]
      %v300 = vld [vmem:[%s1] sm:$0xff]
      %v301 = vld [vmem:[%s1 + $0x8] sm:$0xff]
      %v302 = vld [vmem:[%s1 + $0x10] sm:$0xff]
      %v303 = vld [vmem:[%s1 + $0x18] sm:$0xff]
      %v304 = vld [vmem:[%s2] sm:$0x1]
      %v306 = vlaneseq
      %v307 = vshrl.u32 %v306, 7
      %v308 = vsub.s32 0, %v307
      %v309 = vrot.slane %v304, %v308
      %vm311 = vcmask 261120
      %v313 = vsel %vm311, %v284, 0
      %v316 = vsel %vm311, %v285, 0
      %v319 = vsel %vm311, %v286, 0
      %v322 = vsel %vm311, %v287, 0
      %v325 = vsel %vm311, %v288, 0
      %v328 = vsel %vm311, %v289, 0
      %v331 = vsel %vm311, %v290, 0
      %v334 = vsel %vm311, %v291, 0
      %v337 = vsel %vm311, %v292, 0
      %v340 = vsel %vm311, %v293, 0
      %v343 = vsel %vm311, %v294, 0
      %v346 = vsel %vm311, %v295, 0
      %v349 = vsel %vm311, %v296, 0
      %v352 = vsel %vm311, %v297, 0
      %v355 = vsel %vm311, %v298, 0
      %v358 = vsel %vm311, %v299, 0
      %360 = vmatprep.subr.mxu0 0.0
      %361 = vmatpush1.msra.mxu0 %v300
      %362 = vmatprep.subr.mxu0 0.0
      %363 = vmatpush1.msra.mxu0 %v301
      %364 = vmatprep.subr.mxu0 0.0
      %365 = vmatpush1.msra.mxu0 %v302
      %366 = vmatprep.subr.mxu0 0.0
      %367 = vmatpush1.msra.mxu0 %v303
      %368 = vmatprep.subr.mxu0 0.0
      %369 = vmatpush1.msra.mxu0 0.0
      %370 = vmatprep.subr.mxu0 0.0
      %371 = vmatpush1.msra.mxu0 0.0
      %372 = vmatprep.subr.mxu0 0.0
      %373 = vmatpush1.msra.mxu0 0.0
      %374 = vmatprep.subr.mxu0 0.0
      %375 = vmatpush1.msra.mxu0 0.0
      %376 = vmatprep.subr.mxu0 0.0
      %377 = vmatpush1.msra.mxu0 0.0
      %378 = vmatprep.subr.mxu0 0.0
      %379 = vmatpush1.msra.mxu0 0.0
      %380 = vmatprep.subr.mxu0 0.0
      %381 = vmatpush1.msra.mxu0 0.0
      %382 = vmatprep.subr.mxu0 0.0
      %383 = vmatpush1.msra.mxu0 0.0
      %384 = vmatprep.subr.mxu0 0.0
      %385 = vmatpush1.msra.mxu0 0.0
      %386 = vmatprep.subr.mxu0 0.0
      %387 = vmatpush1.msra.mxu0 0.0
      %388 = vmatprep.subr.mxu0 0.0
      %389 = vmatpush1.msra.mxu0 0.0
      %390 = vmatprep.subr.mxu0 0.0
      %391 = vmatpush1.msra.mxu0 0.0
      %392 = vmatprep.subr.mxu0 0.0
      %393 = vmatpush1.msra.mxu0 0.0
      %394 = vmatprep.subr.mxu0 0.0
      %395 = vmatpush1.msra.mxu0 0.0
      %396 = vmatprep.subr.mxu0 0.0
      %397 = vmatpush1.msra.mxu0 0.0
      %398 = vmatprep.subr.mxu0 0.0
      %399 = vmatpush1.msra.mxu0 0.0
      %400 = vmatprep.subr.mxu0 0.0
      %401 = vmatpush1.msra.mxu0 0.0
      %402 = vmatprep.subr.mxu0 0.0
      %403 = vmatpush1.msra.mxu0 0.0
      %404 = vmatprep.subr.mxu0 0.0
      %405 = vmatpush1.msra.mxu0 0.0
      %406 = vmatprep.subr.mxu0 0.0
      %407 = vmatpush1.msra.mxu0 0.0
      %408 = vmatprep.subr.mxu0 0.0
      %409 = vmatpush1.msra.mxu0 0.0
      %410 = vmatprep.subr.mxu0 0.0
      %411 = vmatpush1.msra.mxu0 0.0
      %412 = vmatprep.subr.mxu0 0.0
      %413 = vmatpush1.msra.mxu0 0.0
      %414 = vmatprep.subr.mxu0 0.0
      %415 = vmatpush1.msra.mxu0 0.0
      %416 = vmatprep.subr.mxu0 0.0
      %417 = vmatpush1.msra.mxu0 0.0
      %418 = vmatprep.subr.mxu0 0.0
      %419 = vmatpush1.msra.mxu0 0.0
      %420 = vmatprep.subr.mxu0 0.0
      %421 = vmatpush1.msra.mxu0 0.0
      %422 = vmatprep.subr.mxu0 0.0
      %423 = vmatpush1.msra.mxu0 0.0
      %424 = vmatprep.mubr.f32.mxu0 0.0
      %425 = vmatmul.mubr.f32.gmra.mrb[0].mxu0 %v313
      %v426 = vpop.f32.mrb[0].mxu0
      %v427 = vadd.f32 %v309, %v426
      %v428 = vpop.f32.mrb[0].mxu0
      %429 = vmatprep.mubr.f32.mxu0 0.0
      %430 = vmatmul.mubr.f32.gmra.mrb[0].mxu0 %v316
      %v431 = vpop.f32.mrb[0].mxu0
      %v432 = vadd.f32 %v309, %v431
      %v433 = vpop.f32.mrb[0].mxu0
      %434 = vmatprep.mubr.f32.mxu0 0.0
      %435 = vmatmul.mubr.f32.gmra.mrb[0].mxu0 %v319
      %v436 = vpop.f32.mrb[0].mxu0
      %v437 = vadd.f32 %v309, %v436
      %v438 = vpop.f32.mrb[0].mxu0
      %439 = vmatprep.mubr.f32.mxu0 0.0
      %440 = vmatmul.mubr.f32.gmra.mrb[0].mxu0 %v322
      %v441 = vpop.f32.mrb[0].mxu0
      %v442 = vadd.f32 %v309, %v441
      %v443 = vpop.f32.mrb[0].mxu0
      %444 = vmatprep.mubr.f32.mxu0 0.0
      %445 = vmatmul.mubr.f32.gmra.mrb[0].mxu0 %v325
      %v446 = vpop.f32.mrb[0].mxu0
      %v447 = vadd.f32 %v309, %v446
      %v448 = vpop.f32.mrb[0].mxu0
      %449 = vmatprep.mubr.f32.mxu0 0.0
      %450 = vmatmul.mubr.f32.gmra.mrb[0].mxu0 %v328
      %v451 = vpop.f32.mrb[0].mxu0
      %v452 = vadd.f32 %v309, %v451
      %v453 = vpop.f32.mrb[0].mxu0
      %454 = vmatprep.mubr.f32.mxu0 0.0
      %455 = vmatmul.mubr.f32.gmra.mrb[0].mxu0 %v331
      %v456 = vpop.f32.mrb[0].mxu0
      %v457 = vadd.f32 %v309, %v456
      %v458 = vpop.f32.mrb[0].mxu0
      %459 = vmatprep.mubr.f32.mxu0 0.0
      %460 = vmatmul.mubr.f32.gmra.mrb[0].mxu0 %v334
      %v461 = vpop.f32.mrb[0].mxu0
      %v462 = vadd.f32 %v309, %v461
      %v463 = vpop.f32.mrb[0].mxu0
      %464 = vmatprep.mubr.f32.mxu0 0.0
      %465 = vmatmul.mubr.f32.gmra.mrb[0].mxu0 %v337
      %v466 = vpop.f32.mrb[0].mxu0
      %v467 = vadd.f32 %v309, %v466
      %v468 = vpop.f32.mrb[0].mxu0
      %469 = vmatprep.mubr.f32.mxu0 0.0
      %470 = vmatmul.mubr.f32.gmra.mrb[0].mxu0 %v340
      %v471 = vpop.f32.mrb[0].mxu0
      %v472 = vadd.f32 %v309, %v471
      %v473 = vpop.f32.mrb[0].mxu0
      %474 = vmatprep.mubr.f32.mxu0 0.0
      %475 = vmatmul.mubr.f32.gmra.mrb[0].mxu0 %v343
      %v476 = vpop.f32.mrb[0].mxu0
      %v477 = vadd.f32 %v309, %v476
      %v478 = vpop.f32.mrb[0].mxu0
      %479 = vmatprep.mubr.f32.mxu0 0.0
      %480 = vmatmul.mubr.f32.gmra.mrb[0].mxu0 %v346
      %v481 = vpop.f32.mrb[0].mxu0
      %v482 = vadd.f32 %v309, %v481
      %v483 = vpop.f32.mrb[0].mxu0
      %484 = vmatprep.mubr.f32.mxu0 0.0
      %485 = vmatmul.mubr.f32.gmra.mrb[0].mxu0 %v349
      %v486 = vpop.f32.mrb[0].mxu0
      %v487 = vadd.f32 %v309, %v486
      %v488 = vpop.f32.mrb[0].mxu0
      %489 = vmatprep.mubr.f32.mxu0 0.0
      %490 = vmatmul.mubr.f32.gmra.mrb[0].mxu0 %v352
      %v491 = vpop.f32.mrb[0].mxu0
      %v492 = vadd.f32 %v309, %v491
      %v493 = vpop.f32.mrb[0].mxu0
      %494 = vmatprep.mubr.f32.mxu0 0.0
      %495 = vmatmul.mubr.f32.gmra.mrb[0].mxu0 %v355
      %v496 = vpop.f32.mrb[0].mxu0
      %v497 = vadd.f32 %v309, %v496
      %v498 = vpop.f32.mrb[0].mxu0
      %499 = vmatprep.mubr.f32.mxu0 0.0
      %500 = vmatmul.mubr.f32.gmra.mrb[0].mxu0 %v358
      %v501 = vpop.f32.mrb[0].mxu0
      %v502 = vadd.f32 %v309, %v501
      %v503 = vpop.f32.mrb[0].mxu0
      %504 = vdwg.mxu0
      %v505 = vtanh.pop %v427
      %v506 = vtanh.pop %v432
      %v507 = vtanh.pop %v437
      %v508 = vtanh.pop %v442
      %v509 = vtanh.pop %v447
      %v510 = vtanh.pop %v452
      %v511 = vtanh.pop %v457
      %v512 = vtanh.pop %v462
      %v513 = vtanh.pop %v467
      %v514 = vtanh.pop %v472
      %v515 = vtanh.pop %v477
      %v516 = vtanh.pop %v482
      %v517 = vtanh.pop %v487
      %v518 = vtanh.pop %v492
      %v519 = vtanh.pop %v497
      %v520 = vtanh.pop %v502
      %v521 = vld [vmem:[%s3] sm:$0xff]
      %v522 = vld [vmem:[%s3 + $0x8] sm:$0xff]
      %v523 = vld [vmem:[%s3 + $0x10] sm:$0xff]
      %v524 = vld [vmem:[%s3 + $0x18] sm:$0xff]
      %v525 = vld [vmem:[%s3 + $0x20] sm:$0xff]
      %v526 = vld [vmem:[%s3 + $0x28] sm:$0xff]
      %v527 = vld [vmem:[%s3 + $0x30] sm:$0xff]
      %v528 = vld [vmem:[%s3 + $0x38] sm:$0xff]
      %v529 = vld [vmem:[%s3 + $0x40] sm:$0xff]
      %v530 = vld [vmem:[%s3 + $0x48] sm:$0xff]
      %v531 = vld [vmem:[%s3 + $0x50] sm:$0xff]
      %v532 = vld [vmem:[%s3 + $0x58] sm:$0xff]
      %v533 = vld [vmem:[%s3 + $0x60] sm:$0xff]
      %v534 = vld [vmem:[%s3 + $0x68] sm:$0xff]
      %v535 = vld [vmem:[%s3 + $0x70] sm:$0xff]
      %v536 = vld [vmem:[%s3 + $0x78] sm:$0xff]
      %v537 = vld [vmem:[%s4] sm:$0x1]
      %v539 = vlaneseq
      %v540 = vshrl.u32 %v539, 7
      %v541 = vsub.s32 0, %v540
      %v542 = vrot.slane %v537, %v541
      %544 = vmatprep.subr.mxu0 0.0
      %545 = vmatpush1.msra.mxu0 %v521
      %546 = vmatprep.subr.mxu0 0.0
      %547 = vmatpush1.msra.mxu0 %v522
      %548 = vmatprep.subr.mxu0 0.0
      %549 = vmatpush1.msra.mxu0 %v523
      %550 = vmatprep.subr.mxu0 0.0
      %551 = vmatpush1.msra.mxu0 %v524
      %552 = vmatprep.subr.mxu0 0.0
      %553 = vmatpush1.msra.mxu0 %v525
      %554 = vmatprep.subr.mxu0 0.0
      %555 = vmatpush1.msra.mxu0 %v526
      %556 = vmatprep.subr.mxu0 0.0
      %557 = vmatpush1.msra.mxu0 %v527
      %558 = vmatprep.subr.mxu0 0.0
      %559 = vmatpush1.msra.mxu0 %v528
      %560 = vmatprep.subr.mxu0 0.0
      %561 = vmatpush1.msra.mxu0 %v529
      %562 = vmatprep.subr.mxu0 0.0
      %563 = vmatpush1.msra.mxu0 %v530
      %564 = vmatprep.subr.mxu0 0.0
      %565 = vmatpush1.msra.mxu0 %v531
      %566 = vmatprep.subr.mxu0 0.0
      %567 = vmatpush1.msra.mxu0 %v532
      %568 = vmatprep.subr.mxu0 0.0
      %569 = vmatpush1.msra.mxu0 %v533
      %570 = vmatprep.subr.mxu0 0.0
      %571 = vmatpush1.msra.mxu0 %v534
      %572 = vmatprep.subr.mxu0 0.0
      %573 = vmatpush1.msra.mxu0 %v535
      %574 = vmatprep.subr.mxu0 0.0
      %575 = vmatpush1.msra.mxu0 %v536
      %576 = vmatprep.subr.mxu0 0.0
      %577 = vmatpush1.msra.mxu0 0.0
      %578 = vmatprep.subr.mxu0 0.0
      %579 = vmatpush1.msra.mxu0 0.0
      %580 = vmatprep.subr.mxu0 0.0
      %581 = vmatpush1.msra.mxu0 0.0
      %582 = vmatprep.subr.mxu0 0.0
      %583 = vmatpush1.msra.mxu0 0.0
      %584 = vmatprep.subr.mxu0 0.0
      %585 = vmatpush1.msra.mxu0 0.0
      %586 = vmatprep.subr.mxu0 0.0
      %587 = vmatpush1.msra.mxu0 0.0
      %588 = vmatprep.subr.mxu0 0.0
      %589 = vmatpush1.msra.mxu0 0.0
      %590 = vmatprep.subr.mxu0 0.0
      %591 = vmatpush1.msra.mxu0 0.0
      %592 = vmatprep.subr.mxu0 0.0
      %593 = vmatpush1.msra.mxu0 0.0
      %594 = vmatprep.subr.mxu0 0.0
      %595 = vmatpush1.msra.mxu0 0.0
      %596 = vmatprep.subr.mxu0 0.0
      %597 = vmatpush1.msra.mxu0 0.0
      %598 = vmatprep.subr.mxu0 0.0
      %599 = vmatpush1.msra.mxu0 0.0
      %600 = vmatprep.subr.mxu0 0.0
      %601 = vmatpush1.msra.mxu0 0.0
      %602 = vmatprep.subr.mxu0 0.0
      %603 = vmatpush1.msra.mxu0 0.0
      %604 = vmatprep.subr.mxu0 0.0
      %605 = vmatpush1.msra.mxu0 0.0
      %606 = vmatprep.subr.mxu0 0.0
      %607 = vmatpush1.msra.mxu0 0.0
      %608 = vmatprep.mubr.f32.mxu0 0.0
      %609 = vmatmul.mubr.f32.gmra.mrb[0].mxu0 %v505
      %v610 = vpop.f32.mrb[0].mxu0
      %v611 = vadd.f32 %v542, %v610
      %v612 = vpop.f32.mrb[0].mxu0
      %613 = vmatprep.mubr.f32.mxu0 0.0
      %614 = vmatmul.mubr.f32.gmra.mrb[0].mxu0 %v506
      %v615 = vpop.f32.mrb[0].mxu0
      %v616 = vadd.f32 %v542, %v615
      %v617 = vpop.f32.mrb[0].mxu0
      %618 = vmatprep.mubr.f32.mxu0 0.0
      %619 = vmatmul.mubr.f32.gmra.mrb[0].mxu0 %v507
      %v620 = vpop.f32.mrb[0].mxu0
      %v621 = vadd.f32 %v542, %v620
      %v622 = vpop.f32.mrb[0].mxu0
      %623 = vmatprep.mubr.f32.mxu0 0.0
      %624 = vmatmul.mubr.f32.gmra.mrb[0].mxu0 %v508
      %v625 = vpop.f32.mrb[0].mxu0
      %v626 = vadd.f32 %v542, %v625
      %v627 = vpop.f32.mrb[0].mxu0
      %628 = vmatprep.mubr.f32.mxu0 0.0
      %629 = vmatmul.mubr.f32.gmra.mrb[0].mxu0 %v509
      %v630 = vpop.f32.mrb[0].mxu0
      %v631 = vadd.f32 %v542, %v630
      %v632 = vpop.f32.mrb[0].mxu0
      %633 = vmatprep.mubr.f32.mxu0 0.0
      %634 = vmatmul.mubr.f32.gmra.mrb[0].mxu0 %v510
      %v635 = vpop.f32.mrb[0].mxu0
      %v636 = vadd.f32 %v542, %v635
      %v637 = vpop.f32.mrb[0].mxu0
      %638 = vmatprep.mubr.f32.mxu0 0.0
      %639 = vmatmul.mubr.f32.gmra.mrb[0].mxu0 %v511
      %v640 = vpop.f32.mrb[0].mxu0
      %v641 = vadd.f32 %v542, %v640
      %v642 = vpop.f32.mrb[0].mxu0
      %643 = vmatprep.mubr.f32.mxu0 0.0
      %644 = vmatmul.mubr.f32.gmra.mrb[0].mxu0 %v512
      %v645 = vpop.f32.mrb[0].mxu0
      %v646 = vadd.f32 %v542, %v645
      %v647 = vpop.f32.mrb[0].mxu0
      %648 = vmatprep.mubr.f32.mxu0 0.0
      %649 = vmatmul.mubr.f32.gmra.mrb[0].mxu0 %v513
      %v650 = vpop.f32.mrb[0].mxu0
      %v651 = vadd.f32 %v542, %v650
      %v652 = vpop.f32.mrb[0].mxu0
      %653 = vmatprep.mubr.f32.mxu0 0.0
      %654 = vmatmul.mubr.f32.gmra.mrb[0].mxu0 %v514
      %v655 = vpop.f32.mrb[0].mxu0
      %v656 = vadd.f32 %v542, %v655
      %v657 = vpop.f32.mrb[0].mxu0
      %658 = vmatprep.mubr.f32.mxu0 0.0
      %659 = vmatmul.mubr.f32.gmra.mrb[0].mxu0 %v515
      %v660 = vpop.f32.mrb[0].mxu0
      %v661 = vadd.f32 %v542, %v660
      %v662 = vpop.f32.mrb[0].mxu0
      %663 = vmatprep.mubr.f32.mxu0 0.0
      %664 = vmatmul.mubr.f32.gmra.mrb[0].mxu0 %v516
      %v665 = vpop.f32.mrb[0].mxu0
      %v666 = vadd.f32 %v542, %v665
      %v667 = vpop.f32.mrb[0].mxu0
      %668 = vmatprep.mubr.f32.mxu0 0.0
      %669 = vmatmul.mubr.f32.gmra.mrb[0].mxu0 %v517
      %v670 = vpop.f32.mrb[0].mxu0
      %v671 = vadd.f32 %v542, %v670
      %v672 = vpop.f32.mrb[0].mxu0
      %673 = vmatprep.mubr.f32.mxu0 0.0
      %674 = vmatmul.mubr.f32.gmra.mrb[0].mxu0 %v518
      %v675 = vpop.f32.mrb[0].mxu0
      %v676 = vadd.f32 %v542, %v675
      %v677 = vpop.f32.mrb[0].mxu0
      %678 = vmatprep.mubr.f32.mxu0 0.0
      %679 = vmatmul.mubr.f32.gmra.mrb[0].mxu0 %v519
      %v680 = vpop.f32.mrb[0].mxu0
      %v681 = vadd.f32 %v542, %v680
      %v682 = vpop.f32.mrb[0].mxu0
      %683 = vmatprep.mubr.f32.mxu0 0.0
      %684 = vmatmul.mubr.f32.gmra.mrb[0].mxu0 %v520
      %v685 = vpop.f32.mrb[0].mxu0
      %v686 = vadd.f32 %v542, %v685
      %v687 = vpop.f32.mrb[0].mxu0
      %688 = vdwg.mxu0
      %v689 = vtanh.pop %v611
      %v690 = vtanh.pop %v616
      %v691 = vtanh.pop %v621
      %v692 = vtanh.pop %v626
      %v693 = vtanh.pop %v631
      %v694 = vtanh.pop %v636
      %v695 = vtanh.pop %v641
      %v696 = vtanh.pop %v646
      %v697 = vtanh.pop %v651
      %v698 = vtanh.pop %v656
      %v699 = vtanh.pop %v661
      %v700 = vtanh.pop %v666
      %v701 = vtanh.pop %v671
      %v702 = vtanh.pop %v676
      %v703 = vtanh.pop %v681
      %v704 = vtanh.pop %v686
      %v705 = vld [vmem:[%s5] sm:$0xff]
      %v706 = vld [vmem:[%s5 + $0x8] sm:$0xff]
      %v707 = vld [vmem:[%s5 + $0x10] sm:$0xff]
      %v708 = vld [vmem:[%s5 + $0x18] sm:$0xff]
      %v709 = vld [vmem:[%s5 + $0x20] sm:$0xff]
      %v710 = vld [vmem:[%s5 + $0x28] sm:$0xff]
      %v711 = vld [vmem:[%s5 + $0x30] sm:$0xff]
      %v712 = vld [vmem:[%s5 + $0x38] sm:$0xff]
      %v713 = vld [vmem:[%s5 + $0x40] sm:$0xff]
      %v714 = vld [vmem:[%s5 + $0x48] sm:$0xff]
      %v715 = vld [vmem:[%s5 + $0x50] sm:$0xff]
      %v716 = vld [vmem:[%s5 + $0x58] sm:$0xff]
      %v717 = vld [vmem:[%s5 + $0x60] sm:$0xff]
      %v718 = vld [vmem:[%s5 + $0x68] sm:$0xff]
      %v719 = vld [vmem:[%s5 + $0x70] sm:$0xff]
      %v720 = vld [vmem:[%s5 + $0x78] sm:$0xff]
      %v721 = vld [vmem:[#allocation2] sm:$0x1]
      %v723 = vlaneseq
      %v724 = vshrl.u32 %v723, 7
      %v725 = vsub.s32 0, %v724
      %v726 = vrot.slane %v721, %v725
      %728 = vmatprep.subr.mxu0 0.0
      %729 = vmatpush1.msra.mxu0 %v705
      %730 = vmatprep.subr.mxu0 0.0
      %731 = vmatpush1.msra.mxu0 %v706
      %732 = vmatprep.subr.mxu0 0.0
      %733 = vmatpush1.msra.mxu0 %v707
      %734 = vmatprep.subr.mxu0 0.0
      %735 = vmatpush1.msra.mxu0 %v708
      %736 = vmatprep.subr.mxu0 0.0
      %737 = vmatpush1.msra.mxu0 %v709
      %738 = vmatprep.subr.mxu0 0.0
      %739 = vmatpush1.msra.mxu0 %v710
      %740 = vmatprep.subr.mxu0 0.0
      %741 = vmatpush1.msra.mxu0 %v711
      %742 = vmatprep.subr.mxu0 0.0
      %743 = vmatpush1.msra.mxu0 %v712
      %744 = vmatprep.subr.mxu0 0.0
      %745 = vmatpush1.msra.mxu0 %v713
      %746 = vmatprep.subr.mxu0 0.0
      %747 = vmatpush1.msra.mxu0 %v714
      %748 = vmatprep.subr.mxu0 0.0
      %749 = vmatpush1.msra.mxu0 %v715
      %750 = vmatprep.subr.mxu0 0.0
      %751 = vmatpush1.msra.mxu0 %v716
      %752 = vmatprep.subr.mxu0 0.0
      %753 = vmatpush1.msra.mxu0 %v717
      %754 = vmatprep.subr.mxu0 0.0
      %755 = vmatpush1.msra.mxu0 %v718
      %756 = vmatprep.subr.mxu0 0.0
      %757 = vmatpush1.msra.mxu0 %v719
      %758 = vmatprep.subr.mxu0 0.0
      %759 = vmatpush1.msra.mxu0 %v720
      %760 = vmatprep.subr.mxu0 0.0
      %761 = vmatpush1.msra.mxu0 0.0
      %762 = vmatprep.subr.mxu0 0.0
      %763 = vmatpush1.msra.mxu0 0.0
      %764 = vmatprep.subr.mxu0 0.0
      %765 = vmatpush1.msra.mxu0 0.0
      %766 = vmatprep.subr.mxu0 0.0
      %767 = vmatpush1.msra.mxu0 0.0
      %768 = vmatprep.subr.mxu0 0.0
      %769 = vmatpush1.msra.mxu0 0.0
      %770 = vmatprep.subr.mxu0 0.0
      %771 = vmatpush1.msra.mxu0 0.0
      %772 = vmatprep.subr.mxu0 0.0
      %773 = vmatpush1.msra.mxu0 0.0
      %774 = vmatprep.subr.mxu0 0.0
      %775 = vmatpush1.msra.mxu0 0.0
      %776 = vmatprep.subr.mxu0 0.0
      %777 = vmatpush1.msra.mxu0 0.0
      %778 = vmatprep.subr.mxu0 0.0
      %779 = vmatpush1.msra.mxu0 0.0
      %780 = vmatprep.subr.mxu0 0.0
      %781 = vmatpush1.msra.mxu0 0.0
      %782 = vmatprep.subr.mxu0 0.0
      %783 = vmatpush1.msra.mxu0 0.0
      %784 = vmatprep.subr.mxu0 0.0
      %785 = vmatpush1.msra.mxu0 0.0
      %786 = vmatprep.subr.mxu0 0.0
      %787 = vmatpush1.msra.mxu0 0.0
      %788 = vmatprep.subr.mxu0 0.0
      %789 = vmatpush1.msra.mxu0 0.0
      %790 = vmatprep.subr.mxu0 0.0
      %791 = vmatpush1.msra.mxu0 0.0
      %792 = vmatprep.mubr.f32.mxu0 0.0
      %793 = vmatmul.mubr.f32.gmra.mrb[0].mxu0 %v689
      %v794 = vpop.f32.mrb[0].mxu0
      %v795 = vadd.f32 %v726, %v794
      %v796 = vpop.f32.mrb[0].mxu0
      %797 = vmatprep.mubr.f32.mxu0 0.0
      %798 = vmatmul.mubr.f32.gmra.mrb[0].mxu0 %v690
      %v799 = vpop.f32.mrb[0].mxu0
      %v800 = vadd.f32 %v726, %v799
      %v801 = vpop.f32.mrb[0].mxu0
      %802 = vmatprep.mubr.f32.mxu0 0.0
      %803 = vmatmul.mubr.f32.gmra.mrb[0].mxu0 %v691
      %v804 = vpop.f32.mrb[0].mxu0
      %v805 = vadd.f32 %v726, %v804
      %v806 = vpop.f32.mrb[0].mxu0
      %807 = vmatprep.mubr.f32.mxu0 0.0
      %808 = vmatmul.mubr.f32.gmra.mrb[0].mxu0 %v692
      %v809 = vpop.f32.mrb[0].mxu0
      %v810 = vadd.f32 %v726, %v809
      %v811 = vpop.f32.mrb[0].mxu0
      %812 = vmatprep.mubr.f32.mxu0 0.0
      %813 = vmatmul.mubr.f32.gmra.mrb[0].mxu0 %v693
      %v814 = vpop.f32.mrb[0].mxu0
      %v815 = vadd.f32 %v726, %v814
      %v816 = vpop.f32.mrb[0].mxu0
      %817 = vmatprep.mubr.f32.mxu0 0.0
      %818 = vmatmul.mubr.f32.gmra.mrb[0].mxu0 %v694
      %v819 = vpop.f32.mrb[0].mxu0
      %v820 = vadd.f32 %v726, %v819
      %v821 = vpop.f32.mrb[0].mxu0
      %822 = vmatprep.mubr.f32.mxu0 0.0
      %823 = vmatmul.mubr.f32.gmra.mrb[0].mxu0 %v695
      %v824 = vpop.f32.mrb[0].mxu0
      %v825 = vadd.f32 %v726, %v824
      %v826 = vpop.f32.mrb[0].mxu0
      %827 = vmatprep.mubr.f32.mxu0 0.0
      %828 = vmatmul.mubr.f32.gmra.mrb[0].mxu0 %v696
      %v829 = vpop.f32.mrb[0].mxu0
      %v830 = vadd.f32 %v726, %v829
      %v831 = vpop.f32.mrb[0].mxu0
      %832 = vmatprep.mubr.f32.mxu0 0.0
      %833 = vmatmul.mubr.f32.gmra.mrb[0].mxu0 %v697
      %v834 = vpop.f32.mrb[0].mxu0
      %v835 = vadd.f32 %v726, %v834
      %v836 = vpop.f32.mrb[0].mxu0
      %837 = vmatprep.mubr.f32.mxu0 0.0
      %838 = vmatmul.mubr.f32.gmra.mrb[0].mxu0 %v698
      %v839 = vpop.f32.mrb[0].mxu0
      %v840 = vadd.f32 %v726, %v839
      %v841 = vpop.f32.mrb[0].mxu0
      %842 = vmatprep.mubr.f32.mxu0 0.0
      %843 = vmatmul.mubr.f32.gmra.mrb[0].mxu0 %v699
      %v844 = vpop.f32.mrb[0].mxu0
      %v845 = vadd.f32 %v726, %v844
      %v846 = vpop.f32.mrb[0].mxu0
      %847 = vmatprep.mubr.f32.mxu0 0.0
      %848 = vmatmul.mubr.f32.gmra.mrb[0].mxu0 %v700
      %v849 = vpop.f32.mrb[0].mxu0
      %v850 = vadd.f32 %v726, %v849
      %v851 = vpop.f32.mrb[0].mxu0
      %852 = vmatprep.mubr.f32.mxu0 0.0
      %853 = vmatmul.mubr.f32.gmra.mrb[0].mxu0 %v701
      %v854 = vpop.f32.mrb[0].mxu0
      %v855 = vadd.f32 %v726, %v854
      %v856 = vpop.f32.mrb[0].mxu0
      %857 = vmatprep.mubr.f32.mxu0 0.0
      %858 = vmatmul.mubr.f32.gmra.mrb[0].mxu0 %v702
      %v859 = vpop.f32.mrb[0].mxu0
      %v860 = vadd.f32 %v726, %v859
      %v861 = vpop.f32.mrb[0].mxu0
      %862 = vmatprep.mubr.f32.mxu0 0.0
      %863 = vmatmul.mubr.f32.gmra.mrb[0].mxu0 %v703
      %v864 = vpop.f32.mrb[0].mxu0
      %v865 = vadd.f32 %v726, %v864
      %v866 = vpop.f32.mrb[0].mxu0
      %867 = vmatprep.mubr.f32.mxu0 0.0
      %868 = vmatmul.mubr.f32.gmra.mrb[0].mxu0 %v704
      %v869 = vpop.f32.mrb[0].mxu0
      %v870 = vadd.f32 %v726, %v869
      %v871 = vpop.f32.mrb[0].mxu0
      %872 = vdwg.mxu0
      %v873 = vxor.u32 %v795, 2147483648
      %v874 = vxor.u32 %v800, 2147483648
      %v875 = vxor.u32 %v805, 2147483648
      %v876 = vxor.u32 %v810, 2147483648
      %v877 = vxor.u32 %v815, 2147483648
      %v878 = vxor.u32 %v820, 2147483648
      %v879 = vxor.u32 %v825, 2147483648
      %v880 = vxor.u32 %v830, 2147483648
      %v881 = vxor.u32 %v835, 2147483648
      %v882 = vxor.u32 %v840, 2147483648
      %v883 = vxor.u32 %v845, 2147483648
      %v884 = vxor.u32 %v850, 2147483648
      %v885 = vxor.u32 %v855, 2147483648
      %v886 = vxor.u32 %v860, 2147483648
      %v887 = vxor.u32 %v865, 2147483648
      %v888 = vxor.u32 %v870, 2147483648
      %v889 = vmul.f32 %v873, 1.442695
      %v890 = vpow.pop %v889
      %v891 = vmul.f32 %v874, 1.442695
      %v892 = vpow.pop %v891
      %v893 = vmul.f32 %v875, 1.442695
      %v894 = vpow.pop %v893
      %v895 = vmul.f32 %v876, 1.442695
      %v896 = vpow.pop %v895
      %v897 = vmul.f32 %v877, 1.442695
      %v898 = vpow.pop %v897
      %v899 = vmul.f32 %v878, 1.442695
      %v900 = vpow.pop %v899
      %v901 = vmul.f32 %v879, 1.442695
      %v902 = vpow.pop %v901
      %v903 = vmul.f32 %v880, 1.442695
      %v904 = vpow.pop %v903
      %v905 = vmul.f32 %v881, 1.442695
      %v906 = vpow.pop %v905
      %v907 = vmul.f32 %v882, 1.442695
      %v908 = vpow.pop %v907
      %v909 = vmul.f32 %v883, 1.442695
      %v910 = vpow.pop %v909
      %v911 = vmul.f32 %v884, 1.442695
      %v912 = vpow.pop %v911
      %v913 = vmul.f32 %v885, 1.442695
      %v914 = vpow.pop %v913
      %v915 = vmul.f32 %v886, 1.442695
      %v916 = vpow.pop %v915
      %v917 = vmul.f32 %v887, 1.442695
      %v918 = vpow.pop %v917
      %v919 = vmul.f32 %v888, 1.442695
      %v920 = vpow.pop %v919
      %v921 = vadd.f32 %v890, 1.0
      %v922 = vadd.f32 %v892, 1.0
      %v923 = vadd.f32 %v894, 1.0
      %v924 = vadd.f32 %v896, 1.0
      %v925 = vadd.f32 %v898, 1.0
      %v926 = vadd.f32 %v900, 1.0
      %v927 = vadd.f32 %v902, 1.0
      %v928 = vadd.f32 %v904, 1.0
      %v929 = vadd.f32 %v906, 1.0
      %v930 = vadd.f32 %v908, 1.0
      %v931 = vadd.f32 %v910, 1.0
      %v932 = vadd.f32 %v912, 1.0
      %v933 = vadd.f32 %v914, 1.0
      %v934 = vadd.f32 %v916, 1.0
      %v935 = vadd.f32 %v918, 1.0
      %v936 = vadd.f32 %v920, 1.0
      %v937 = vrcp.pop %v921
      %v938 = vmul.f32 1.0, %v937
      %v939 = vrcp.pop %v922
      %v940 = vmul.f32 1.0, %v939
      %v941 = vrcp.pop %v923
      %v942 = vmul.f32 1.0, %v941
      %v943 = vrcp.pop %v924
      %v944 = vmul.f32 1.0, %v943
      %v945 = vrcp.pop %v925
      %v946 = vmul.f32 1.0, %v945
      %v947 = vrcp.pop %v926
      %v948 = vmul.f32 1.0, %v947
      %v949 = vrcp.pop %v927
      %v950 = vmul.f32 1.0, %v949
      %v951 = vrcp.pop %v928
      %v952 = vmul.f32 1.0, %v951
      %v953 = vrcp.pop %v929
      %v954 = vmul.f32 1.0, %v953
      %v955 = vrcp.pop %v930
      %v956 = vmul.f32 1.0, %v955
      %v957 = vrcp.pop %v931
      %v958 = vmul.f32 1.0, %v957
      %v959 = vrcp.pop %v932
      %v960 = vmul.f32 1.0, %v959
      %v961 = vrcp.pop %v933
      %v962 = vmul.f32 1.0, %v961
      %v963 = vrcp.pop %v934
      %v964 = vmul.f32 1.0, %v963
      %v965 = vrcp.pop %v935
      %v966 = vmul.f32 1.0, %v965
      %v967 = vrcp.pop %v936
      %v968 = vmul.f32 1.0, %v967
      %vm969 = vcmask 7168
      %970 = vst.msk [vmem:[%s282] sm:$0xff] %vm969, %v938
      %971 = vst.msk [vmem:[%s282 + $0x8] sm:$0xff] %vm969, %v940
      %972 = vst.msk [vmem:[%s282 + $0x10] sm:$0xff] %vm969, %v942
      %973 = vst.msk [vmem:[%s282 + $0x18] sm:$0xff] %vm969, %v944
      %974 = vst.msk [vmem:[%s282 + $0x20] sm:$0xff] %vm969, %v946
      %975 = vst.msk [vmem:[%s282 + $0x28] sm:$0xff] %vm969, %v948
      %976 = vst.msk [vmem:[%s282 + $0x30] sm:$0xff] %vm969, %v950
      %977 = vst.msk [vmem:[%s282 + $0x38] sm:$0xff] %vm969, %v952
      %978 = vst.msk [vmem:[%s282 + $0x40] sm:$0xff] %vm969, %v954
      %979 = vst.msk [vmem:[%s282 + $0x48] sm:$0xff] %vm969, %v956
      %980 = vst.msk [vmem:[%s282 + $0x50] sm:$0xff] %vm969, %v958
      %981 = vst.msk [vmem:[%s282 + $0x58] sm:$0xff] %vm969, %v960
      %982 = vst.msk [vmem:[%s282 + $0x60] sm:$0xff] %vm969, %v962
      %983 = vst.msk [vmem:[%s282 + $0x68] sm:$0xff] %vm969, %v964
      %984 = vst.msk [vmem:[%s282 + $0x70] sm:$0xff] %vm969, %v966
      %985 = vst.msk [vmem:[%s282 + $0x78] sm:$0xff] %vm969, %v968
      %s986 = smul.u32 16, %s20
      %p987 = scmp.lt.s32.totalorder %s986, 31
      %s988 = scalar_select %p987, %s986, 31
      %s989 = smul.addr %s988, 8
      %s990 = scalar_lea.vmem %s7, %s989
      // Predicated region
      $region49: #{tpu_custom_call.1} parent=47 // pred_check
        %p991 = pneg %p190
      $region50: #{tpu_custom_call.1} parent=47 // pred_check_branch
        %993 = sbr.rel (%p991) target = $region52
      $region51: #{tpu_custom_call.1} parent=47 // pred_region
        %s994 = smul.u32 16, %s20
      $region52: #{tpu_custom_call.1} parent=47 // pred_fallthru
        _
    $region48: #{tpu_custom_call.1} parent=5 // pred_fallthru
      _
    %p995 = scmp.le.s32.totalorder 2, %s15
    // Predicated region
    $region53: #{tpu_custom_call.1} parent=5 // pred_check
      %p996 = pneg %p995
    $region54: #{tpu_custom_call.1} parent=5 // pred_check_branch
      %998 = sbr.rel (%p996) target = $region56
    $region55: #{tpu_custom_call.1} parent=5 // pred_region
      %s999 = ssub.s32 %s15, 2
      // Predicated region
      $region57: #{tpu_custom_call.1} parent=55 // pred_check
        %p1000 = pneg %p196
      $region58: #{tpu_custom_call.1} parent=55 // pred_check_branch
        %1002 = sbr.rel (%p1000) target = $region60
      $region59: #{tpu_custom_call.1} parent=55 // pred_region
        %s1003 = smul.u32 16, %s21
        %p1004 = scmp.lt.s32.totalorder %s1003, 31
        %s1005 = scalar_select %p1004, %s1003, 31
        %s1006 = smul.addr %s1005, 8
        %s1007 = scalar_lea.vmem %s7, %s1006
      $region60: #{tpu_custom_call.1} parent=55 // pred_fallthru
        _
    $region56: #{tpu_custom_call.1} parent=5 // pred_fallthru
      _
  $region6: #{tpu_custom_call.1} parent=0 // loop_footer
    %s19 = sadd.s32 1, %s15
  $region7: #{tpu_custom_call.1} parent=0 // loop_footer_branch
    %14 = sbr.rel target = $region3
  $region8: #{tpu_custom_call.1} parent=0 // loop_exit
    _

</llo_original>
